<compile_context>
chip_gen: v5e
topology: v5e:2x2
jax: 0.10.0
libtpu: 0.0.40
codegen_flags: <defaults>
</compile_context>

<pallas_src>
import functools

import jax
import jax.numpy as jnp
import numpy as np
from jax.experimental import pallas as pl
from jax.experimental.pallas import tpu as pltpu


# ----------------------------------------------------------------------------
# Shared helpers
# ----------------------------------------------------------------------------

def _normalize_alpha(alpha, n_classes):
    """alpha as a tuple of python floats (baked into the kernel as constants)."""
    if alpha is None:
        return None
    if isinstance(alpha, (float, int)):
        alpha = [float(alpha), 1.0 - float(alpha)]
    vec = np.asarray(alpha, dtype=np.float64).reshape(-1)
    if vec.shape[0] < n_classes:
        raise ValueError(
            f"alpha has {vec.shape[0]} entries but input has {n_classes} classes")
    return tuple(float(v) for v in vec[:n_classes])


def _neg_focal_loss(logpt, pt, gamma):
    """-(1 - pt)**gamma * logpt, small integer gammas unrolled to multiplies."""
    gi = int(gamma)
    if float(gamma) == float(gi) and 0 <= gi <= 8:
        if gi == 0:
            return -logpt
        omp = 1.0 - pt
        mod = omp
        for _ in range(gi - 1):
            mod = mod * omp
        return -(mod * logpt)
    return -((1.0 - pt) ** gamma * logpt)


def _alpha_gather(t, alpha_vec):
    """at[pos] = alpha[t[pos]] via chained selects against constant class ids."""
    at = None
    for c, a in enumerate(alpha_vec):
        sel = jnp.where(t == c, jnp.float32(a), jnp.float32(0.0))
        at = sel if at is None else at + sel
    return at


# ----------------------------------------------------------------------------
# Main path: spatial-dense layout (HW % 128 == 0)
# ----------------------------------------------------------------------------

def _focal_loss_kernel_dense(x_ref, t_ref, out_ref, *, gamma, alpha_vec,
                             n_classes, n128, t_sub, tiles_per_split,
                             needs_mask):
    s = pl.program_id(1)
    h = pl.program_id(2)

    # Output block is resident across the h (reduction) axis: zero once per (n, s).
    @pl.when(h == 0)
    def _():
        out_ref[...] = jnp.zeros_like(out_ref)

    t = t_ref[0, 0]                                     # (t_sub, 128) int

    def xc(c):                                          # (t_sub, 128) f32
        return x_ref[0, c].astype(jnp.float32)

    # Class max: the class axis is a leading (non-vreg) axis -> C-1 full-vreg
    # VPU maxes, no sublane padding, no XLU relayouts.
    m = xc(0)
    for c in range(1, n_classes):
        m = jnp.maximum(m, xc(c))

    # Fused pass: sum-of-exp and target-class gather (select, not one-hot mul).
    se = None
    zt = None
    for c in range(n_classes):
        zc = xc(c) - m
        ec = jnp.exp(zc)
        se = ec if se is None else se + ec
        sel = jnp.where(t == c, zc, jnp.float32(0.0))
        zt = sel if zt is None else zt + sel

    logpt = zt - jnp.log(se)                            # log softmax @ target
    pt = jnp.exp(logpt)                                 # before alpha (as in torch)

    if alpha_vec is not None:
        logpt = logpt * _alpha_gather(t, alpha_vec)

    loss = _neg_focal_loss(logpt, pt, gamma)            # (t_sub, 128)

    if needs_mask:
        # Zero rows past the real spatial extent (ragged tail / clamped blocks).
        sub0 = (s * tiles_per_split + h) * t_sub
        row = jax.lax.broadcasted_iota(jnp.int32, loss.shape, 0) + sub0
        loss = jnp.where(row < n128, loss, jnp.float32(0.0))

    # Fold (t_sub, 128) -> (acc_rows, 128) with vreg-aligned slice adds and
    # accumulate into the resident per-(sample, split) output block.
    if t_sub % 8 == 0:
        folded = loss[0:8]
        for i in range(1, t_sub // 8):
            folded = folded + loss[8 * i:8 * (i + 1)]
    else:
        folded = loss                                   # t_sub == acc_rows < 8
    out_ref[0, 0] += folded


def _pick_t_sub(n128, n_classes, itemsize, max_block_bytes=2 * 1024 * 1024):
    """Sub-tile row count (each row = 128 spatial columns) for the dense path."""
    if n128 <= 8:
        return int(n128)                                # full extent, < 1 vreg of rows
    per_row = n_classes * 128 * itemsize                # logits bytes per sub-row
    t = max(8, (max_block_bytes // per_row) // 8 * 8)
    cap = ((n128 + 7) // 8) * 8                         # no point exceeding full row
    return int(min(t, cap))


def _focal_loss_dense(x4, t4, *, gamma, alpha_vec, t_sub, hw_splits):
    N, C, n128, _ = x4.shape
    itemsize = jnp.dtype(x4.dtype).itemsize

    if t_sub is None:
        t_sub = _pick_t_sub(n128, C, itemsize)
    else:
        t_sub = int(t_sub)
        t_sub = n128 if n128 < 8 else max(
            8, min((t_sub // 8) * 8, ((n128 + 7) // 8) * 8))
    n_blocks = pl.cdiv(n128, t_sub)

    if hw_splits is None:
        # Keep both TensorCores busy (v7x) even when the batch is one sample.
        hw_splits = 2 if (N == 1 and n_blocks >= 2) else 1
    hw_splits = max(1, min(int(hw_splits), n_blocks))
    tps = pl.cdiv(n_blocks, hw_splits)                  # spatial tiles per split
    last_blk = n_blocks - 1

    acc_rows = 8 if t_sub % 8 == 0 else t_sub
    needs_mask = hw_splits * tps * t_sub > n128

    kernel = functools.partial(
        _focal_loss_kernel_dense, gamma=float(gamma), alpha_vec=alpha_vec,
        n_classes=C, n128=n128, t_sub=t_sub, tiles_per_split=tps,
        needs_mask=needs_mask)

    def blk(n, s, h):
        # Clamp so padded grid steps re-read a valid block (fully masked above).
        return (n, 0, jnp.minimum(s * tps + h, last_blk), 0)

    out = pl.pallas_call(
        kernel,
        out_shape=jax.ShapeDtypeStruct((N, hw_splits, acc_rows, 128),
                                       jnp.float32),
        grid_spec=pltpu.PrefetchScalarGridSpec(
            num_scalar_prefetch=0,
            grid=(N, hw_splits, tps),
            in_specs=[
                pl.BlockSpec((1, C, t_sub, 128), blk),   # logits (lane-dense)
                pl.BlockSpec((1, 1, t_sub, 128), blk),   # targets
            ],
            out_specs=pl.BlockSpec((1, 1, acc_rows, 128),
                                   lambda n, s, h: (n, s, 0, 0)),
        ),
        compiler_params=pltpu.CompilerParams(
            dimension_semantics=("parallel", "parallel", "arbitrary"),
            vmem_limit_bytes=32 * 1024 * 1024),
    )(x4, t4)
    return jnp.sum(out)                                  # tiny (N*splits*8*128)


# ----------------------------------------------------------------------------
# Fallback path: flat (N, C, HW) layout (HW % 128 != 0)
# ----------------------------------------------------------------------------

def _focal_loss_kernel_flat(x_ref, t_ref, out_ref, *, gamma, alpha_vec,
                            n_classes, hw, tile_hw, needs_mask):
    h = pl.program_id(1)

    @pl.when(h == 0)
    def _():
        out_ref[...] = jnp.zeros_like(out_ref)

    x = x_ref[0].astype(jnp.float32)                    # (C, tile_hw)
    t = t_ref[0]                                        # (1, tile_hw)

    m = jnp.max(x, axis=0, keepdims=True)               # hardware sublane reduce
    z = x - m
    lse = jnp.log(jnp.sum(jnp.exp(z), axis=0, keepdims=True))

    cls = jax.lax.broadcasted_iota(jnp.int32, (n_classes, 1), 0)   # (C, 1)
    zt = jnp.sum(jnp.where(cls == t, z, jnp.float32(0.0)),
                 axis=0, keepdims=True)                 # (1, tile_hw)
    logpt = zt - lse
    pt = jnp.exp(logpt)

    if alpha_vec is not None:
        logpt = logpt * _alpha_gather(t, alpha_vec)

    loss = _neg_focal_loss(logpt, pt, gamma)            # (1, tile_hw)

    if needs_mask:
        col = jax.lax.broadcasted_iota(jnp.int32, loss.shape, 1) + h * tile_hw
        loss = jnp.where(col < hw, loss, jnp.float32(0.0))

    out_ref[...] += loss[None]


def _pick_tile_hw(hw, n_classes, itemsize, max_block_bytes=2 * 1024 * 1024):
    c_pad = ((n_classes + 7) // 8) * 8                  # sublane padding is real VMEM
    if c_pad * hw * itemsize <= max_block_bytes:
        return int(hw)                                  # whole row: one tile per n
    t = max_block_bytes // (c_pad * itemsize)
    return int(max(128, (t // 128) * 128))


def _focal_loss_flat(x3, t3, *, gamma, alpha_vec, tile_hw):
    N, C, hw = x3.shape
    itemsize = jnp.dtype(x3.dtype).itemsize
    if tile_hw is None:
        tile_hw = _pick_tile_hw(hw, C, itemsize)
    n_tiles = pl.cdiv(hw, tile_hw)
    needs_mask = n_tiles * tile_hw > hw

    kernel = functools.partial(
        _focal_loss_kernel_flat, gamma=float(gamma), alpha_vec=alpha_vec,
        n_classes=C, hw=hw, tile_hw=tile_hw, needs_mask=needs_mask)

    per_col = pl.pallas_call(
        kernel,
        out_shape=jax.ShapeDtypeStruct((N, 1, tile_hw), jnp.float32),
        grid_spec=pltpu.PrefetchScalarGridSpec(
            num_scalar_prefetch=0,
            grid=(N, n_tiles),
            in_specs=[
                pl.BlockSpec((1, C, tile_hw), lambda n, h: (n, 0, h)),  # logits
                pl.BlockSpec((1, 1, tile_hw), lambda n, h: (n, 0, h)),  # targets
            ],
            out_specs=pl.BlockSpec((1, 1, tile_hw), lambda n, h: (n, 0, 0)),
        ),
        compiler_params=pltpu.CompilerParams(
            dimension_semantics=("parallel", "arbitrary"),
            vmem_limit_bytes=32 * 1024 * 1024),
    )(x3, t3)
    return jnp.sum(per_col)


# ----------------------------------------------------------------------------
# Public wrapper
# ----------------------------------------------------------------------------

def focal_loss(logits_nchw, target_nhw, *, gamma=2.0, alpha=None,
               size_average=True, t_sub=None, hw_splits=None, tile_hw=None):
    """Focal loss matching the PyTorch module's forward pass.

    logits_nchw: (N, C, H, W) float32 / bfloat16 logits.
    target_nhw:  (N, H, W) integer class indices in [0, C).  Narrow int dtypes
                 (int8/int16) are passed through unchanged (bandwidth win).
    alpha:       None, scalar a (-> [a, 1 - a]), or per-class weights (len >= C);
                 baked into the kernel as compile-time constants.
    """
    N, C, H, W = logits_nchw.shape
    HW = H * W

    alpha_vec = _normalize_alpha(alpha, C)

    t = target_nhw
    if not jnp.issubdtype(t.dtype, jnp.integer):
        t = t.astype(jnp.int32)

    if HW % 128 == 0:
        # Spatial-dense layout: free reshape; the 128-lane axis is fully dense
        # and the (small) class axis is a leading, non-vreg axis.
        total = _focal_loss_dense(
            logits_nchw.reshape(N, C, HW // 128, 128),
            t.reshape(N, 1, HW // 128, 128),
            gamma=gamma, alpha_vec=alpha_vec, t_sub=t_sub, hw_splits=hw_splits)
    else:
        # Fallback: flat (N, C, HW) layout with the class axis on sublanes.
        total = _focal_loss_flat(
            logits_nchw.reshape(N, C, HW), t.reshape(N, 1, HW),
            gamma=gamma, alpha_vec=alpha_vec, tile_hw=tile_hw)

    if size_average:
        return total / jnp.float32(N * HW)
    return total


# ----------------------------------------------------------------------------
# Pure-JAX reference (mirrors the PyTorch forward exactly)
# ----------------------------------------------------------------------------

def _reference_focal_loss(logits_nchw, target_nhw, *, gamma, alpha, size_average):
    N, C, H, W = logits_nchw.shape
    x = logits_nchw.reshape(N, C, H * W).transpose(0, 2, 1).reshape(-1, C)
    t = target_nhw.reshape(-1)
    logp = jax.nn.log_softmax(x.astype(jnp.float32), axis=1)
    logpt = jnp.take_along_axis(logp, t[:, None].astype(jnp.int32), axis=1)[:, 0]
    pt = jnp.exp(logpt)
    if alpha is not None:
        if isinstance(alpha, (float, int)):
            alpha = [float(alpha), 1.0 - float(alpha)]
        at = jnp.asarray(alpha, jnp.float32)[t]
        logpt = logpt * at
    loss = -1.0 * (1.0 - pt) ** gamma * logpt
    return loss.mean() if size_average else loss.sum()


if __name__ == "__main__":
    key = jax.random.PRNGKey(0)
    k1, k2, k3, k4, k5, k6 = jax.random.split(key, 6)

    # Test 1: dense path (HW % 128 == 0), gamma=2, per-class alpha, mean.
    N, C, H, W = 2, 4, 16, 16
    logits = jax.random.normal(k1, (N, C, H, W), dtype=jnp.float32)
    target = jax.random.randint(k2, (N, H, W), 0, C, dtype=jnp.int32)
    alpha = [0.25, 0.25, 0.25, 0.25]
    out1 = jax.block_until_ready(
        focal_loss(logits, target, gamma=2.0, alpha=alpha, size_average=True))
    ref1 = _reference_focal_loss(logits, target, gamma=2.0, alpha=alpha,
                                 size_average=True)
    assert jnp.allclose(out1, ref1, rtol=1e-5, atol=1e-5), (out1, ref1)

    # Test 2: dense path, gamma=0, no alpha, sum reduction.
    out2 = jax.block_until_ready(
        focal_loss(logits, target, gamma=0.0, alpha=None, size_average=False))
    ref2 = _reference_focal_loss(logits, target, gamma=0.0, alpha=None,
                                 size_average=False)
    assert jnp.allclose(out2, ref2, rtol=1e-5, atol=1e-5), (out2, ref2)

    # Test 3: flat fallback (HW=200 not a multiple of 128), ragged tail tile.
    N3, C3, H3, W3 = 2, 3, 10, 20
    logits3 = jax.random.normal(k3, (N3, C3, H3, W3), dtype=jnp.float32)
    target3 = jax.random.randint(k4, (N3, H3, W3), 0, C3, dtype=jnp.int32)
    alpha3 = [0.5, 0.3, 0.2]
    out3 = jax.block_until_ready(
        focal_loss(logits3, target3, gamma=2.0, alpha=alpha3,
                   size_average=True, tile_hw=128))
    ref3 = _reference_focal_loss(logits3, target3, gamma=2.0, alpha=alpha3,
                                 size_average=True)
    assert jnp.allclose(out3, ref3, rtol=1e-5, atol=1e-5), (out3, ref3)

    # Test 4: dense path with a 2-way spatial split (v7x dual-TensorCore path),
    # ragged sub-tile tail and clamped block indices (N=1, HW=2304, t_sub=8).
    N4, C4, H4, W4 = 1, 3, 48, 48
    logits4 = jax.random.normal(k5, (N4, C4, H4, W4), dtype=jnp.float32)
    target4 = jax.random.randint(k6, (N4, H4, W4), 0, C4, dtype=jnp.int32)
    alpha4 = [0.2, 0.3, 0.5]
    out4 = jax.block_until_ready(
        focal_loss(logits4, target4, gamma=2.0, alpha=alpha4,
                   size_average=True, t_sub=8, hw_splits=2))
    ref4 = _reference_focal_loss(logits4, target4, gamma=2.0, alpha=alpha4,
                                 size_average=True)
    assert jnp.allclose(out4, ref4, rtol=1e-5, atol=1e-5), (out4, ref4)

    print("KERNEL_OK")
</pallas_src>

<mosaic_0001>
module attributes {stable_mosaic.version = 11 : i64} {
  func.func @_focal_loss_kernel_dense(%arg0: i32, %arg1: i32, %arg2: i32, %arg3: memref<1x4x2x128xf32, #tpu.memory_space<vmem>>, %arg4: memref<1x1x2x128xi32, #tpu.memory_space<vmem>>, %arg5: memref<1x1x2x128xf32, #tpu.memory_space<vmem>>) attributes {dimension_semantics = [#tpu.dimension_semantics<parallel>, #tpu.dimension_semantics<parallel>, #tpu.dimension_semantics<arbitrary>], iteration_bounds = array<i64: 2, 1, 1>, scalar_prefetch = 0 : i64, scratch_operands = 0 : i64, tpu.core_type = #tpu.core_type<tc>, window_params = [{transform_indices = @transform_0, window_bounds = array<i64: 1, 4, 2, 128>}, {transform_indices = @transform_1, window_bounds = array<i64: 1, 1, 2, 128>}, {transform_indices = @transform_2, window_bounds = array<i64: 1, 1, 2, 128>}]} {
    %c0_i32 = arith.constant 0 : i32
    %0 = arith.cmpi eq, %arg2, %c0_i32 : i32
    %1 = arith.extui %0 : i1 to i32
    %c0_i32_0 = arith.constant 0 : i32
    %2 = arith.cmpi ne, %1, %c0_i32_0 : i32
    scf.if %2 {
      %cst_59 = arith.constant 0.000000e+00 : f32
      %93 = vector.broadcast %cst_59 : f32 to vector<1x1x2x128xf32>
      %c0_60 = arith.constant 0 : index
      %c0_61 = arith.constant 0 : index
      %c0_62 = arith.constant 0 : index
      %c0_63 = arith.constant 0 : index
      %94 = vector.load %arg5[%c0_60, %c0_61, %c0_62, %c0_63] : memref<1x1x2x128xf32, #tpu.memory_space<vmem>>, vector<1x1x2x128xf32>
      tpu.vector_store %arg5[%c0_60, %c0_61, %c0_62, %c0_63], %93 {strides = array<i32>} : memref<1x1x2x128xf32, #tpu.memory_space<vmem>>, vector<1x1x2x128xf32>,
    } else {
    }
    %c0 = arith.constant 0 : index
    %c0_1 = arith.constant 0 : index
    %c0_2 = arith.constant 0 : index
    %c0_3 = arith.constant 0 : index
    %3 = vector.load %arg4[%c0, %c0_1, %c0_2, %c0_3] : memref<1x1x2x128xi32, #tpu.memory_space<vmem>>, vector<1x1x2x128xi32>
    %4 = vector.shape_cast %3 : vector<1x1x2x128xi32> to vector<2x128xi32>
    %c0_4 = arith.constant 0 : index
    %c0_5 = arith.constant 0 : index
    %c0_6 = arith.constant 0 : index
    %c0_7 = arith.constant 0 : index
    %5 = vector.load %arg3[%c0_4, %c0_5, %c0_6, %c0_7] : memref<1x4x2x128xf32, #tpu.memory_space<vmem>>, vector<1x1x2x128xf32>
    %6 = vector.shape_cast %5 : vector<1x1x2x128xf32> to vector<2x128xf32>
    %c0_8 = arith.constant 0 : index
    %c1 = arith.constant 1 : index
    %c0_9 = arith.constant 0 : index
    %c0_10 = arith.constant 0 : index
    %7 = vector.load %arg3[%c0_8, %c1, %c0_9, %c0_10] : memref<1x4x2x128xf32, #tpu.memory_space<vmem>>, vector<1x1x2x128xf32>
    %8 = vector.shape_cast %7 : vector<1x1x2x128xf32> to vector<2x128xf32>
    %9 = arith.maximumf %6, %8 : vector<2x128xf32>
    %c0_11 = arith.constant 0 : index
    %c2 = arith.constant 2 : index
    %c0_12 = arith.constant 0 : index
    %c0_13 = arith.constant 0 : index
    %10 = vector.load %arg3[%c0_11, %c2, %c0_12, %c0_13] : memref<1x4x2x128xf32, #tpu.memory_space<vmem>>, vector<1x1x2x128xf32>
    %11 = vector.shape_cast %10 : vector<1x1x2x128xf32> to vector<2x128xf32>
    %12 = arith.maximumf %9, %11 : vector<2x128xf32>
    %c0_14 = arith.constant 0 : index
    %c3 = arith.constant 3 : index
    %c0_15 = arith.constant 0 : index
    %c0_16 = arith.constant 0 : index
    %13 = vector.load %arg3[%c0_14, %c3, %c0_15, %c0_16] : memref<1x4x2x128xf32, #tpu.memory_space<vmem>>, vector<1x1x2x128xf32>
    %14 = vector.shape_cast %13 : vector<1x1x2x128xf32> to vector<2x128xf32>
    %15 = arith.maximumf %12, %14 : vector<2x128xf32>
    %c0_17 = arith.constant 0 : index
    %c0_18 = arith.constant 0 : index
    %c0_19 = arith.constant 0 : index
    %c0_20 = arith.constant 0 : index
    %16 = vector.load %arg3[%c0_17, %c0_18, %c0_19, %c0_20] : memref<1x4x2x128xf32, #tpu.memory_space<vmem>>, vector<1x1x2x128xf32>
    %17 = vector.shape_cast %16 : vector<1x1x2x128xf32> to vector<2x128xf32>
    %18 = arith.subf %17, %15 : vector<2x128xf32>
    %19 = math.exp %18 : vector<2x128xf32>
    %c0_i32_21 = arith.constant 0 : i32
    %20 = vector.broadcast %c0_i32_21 : i32 to vector<2x128xi32>
    %21 = arith.cmpi eq, %4, %20 : vector<2x128xi32>
    %cst = arith.constant 0.000000e+00 : f32
    %22 = vector.broadcast %cst : f32 to vector<2x128xf32>
    %23 = arith.select %21, %18, %22 : vector<2x128xi1>, vector<2x128xf32>
    %c0_22 = arith.constant 0 : index
    %c1_23 = arith.constant 1 : index
    %c0_24 = arith.constant 0 : index
    %c0_25 = arith.constant 0 : index
    %24 = vector.load %arg3[%c0_22, %c1_23, %c0_24, %c0_25] : memref<1x4x2x128xf32, #tpu.memory_space<vmem>>, vector<1x1x2x128xf32>
    %25 = vector.shape_cast %24 : vector<1x1x2x128xf32> to vector<2x128xf32>
    %26 = arith.subf %25, %15 : vector<2x128xf32>
    %27 = math.exp %26 : vector<2x128xf32>
    %28 = arith.addf %19, %27 : vector<2x128xf32>
    %c1_i32 = arith.constant 1 : i32
    %29 = vector.broadcast %c1_i32 : i32 to vector<2x128xi32>
    %30 = arith.cmpi eq, %4, %29 : vector<2x128xi32>
    %cst_26 = arith.constant 0.000000e+00 : f32
    %31 = vector.broadcast %cst_26 : f32 to vector<2x128xf32>
    %32 = arith.select %30, %26, %31 : vector<2x128xi1>, vector<2x128xf32>
    %33 = arith.addf %23, %32 : vector<2x128xf32>
    %c0_27 = arith.constant 0 : index
    %c2_28 = arith.constant 2 : index
    %c0_29 = arith.constant 0 : index
    %c0_30 = arith.constant 0 : index
    %34 = vector.load %arg3[%c0_27, %c2_28, %c0_29, %c0_30] : memref<1x4x2x128xf32, #tpu.memory_space<vmem>>, vector<1x1x2x128xf32>
    %35 = vector.shape_cast %34 : vector<1x1x2x128xf32> to vector<2x128xf32>
    %36 = arith.subf %35, %15 : vector<2x128xf32>
    %37 = math.exp %36 : vector<2x128xf32>
    %38 = arith.addf %28, %37 : vector<2x128xf32>
    %c2_i32 = arith.constant 2 : i32
    %39 = vector.broadcast %c2_i32 : i32 to vector<2x128xi32>
    %40 = arith.cmpi eq, %4, %39 : vector<2x128xi32>
    %cst_31 = arith.constant 0.000000e+00 : f32
    %41 = vector.broadcast %cst_31 : f32 to vector<2x128xf32>
    %42 = arith.select %40, %36, %41 : vector<2x128xi1>, vector<2x128xf32>
    %43 = arith.addf %33, %42 : vector<2x128xf32>
    %c0_32 = arith.constant 0 : index
    %c3_33 = arith.constant 3 : index
    %c0_34 = arith.constant 0 : index
    %c0_35 = arith.constant 0 : index
    %44 = vector.load %arg3[%c0_32, %c3_33, %c0_34, %c0_35] : memref<1x4x2x128xf32, #tpu.memory_space<vmem>>, vector<1x1x2x128xf32>
    %45 = vector.shape_cast %44 : vector<1x1x2x128xf32> to vector<2x128xf32>
    %46 = arith.subf %45, %15 : vector<2x128xf32>
    %47 = math.exp %46 : vector<2x128xf32>
    %48 = arith.addf %38, %47 : vector<2x128xf32>
    %c3_i32 = arith.constant 3 : i32
    %49 = vector.broadcast %c3_i32 : i32 to vector<2x128xi32>
    %50 = arith.cmpi eq, %4, %49 : vector<2x128xi32>
    %cst_36 = arith.constant 0.000000e+00 : f32
    %51 = vector.broadcast %cst_36 : f32 to vector<2x128xf32>
    %52 = arith.select %50, %46, %51 : vector<2x128xi1>, vector<2x128xf32>
    %53 = arith.addf %43, %52 : vector<2x128xf32>
    %54 = math.log %48 : vector<2x128xf32>
    %55 = arith.subf %53, %54 : vector<2x128xf32>
    %56 = math.exp %55 : vector<2x128xf32>
    %c0_i32_37 = arith.constant 0 : i32
    %57 = vector.broadcast %c0_i32_37 : i32 to vector<2x128xi32>
    %58 = arith.cmpi eq, %4, %57 : vector<2x128xi32>
    %cst_38 = arith.constant 2.500000e-01 : f32
    %cst_39 = arith.constant 0.000000e+00 : f32
    %59 = vector.broadcast %cst_38 : f32 to vector<2x128xf32>
    %60 = vector.broadcast %cst_39 : f32 to vector<2x128xf32>
    %61 = arith.select %58, %59, %60 : vector<2x128xi1>, vector<2x128xf32>
    %c1_i32_40 = arith.constant 1 : i32
    %62 = vector.broadcast %c1_i32_40 : i32 to vector<2x128xi32>
    %63 = arith.cmpi eq, %4, %62 : vector<2x128xi32>
    %cst_41 = arith.constant 2.500000e-01 : f32
    %cst_42 = arith.constant 0.000000e+00 : f32
    %64 = vector.broadcast %cst_41 : f32 to vector<2x128xf32>
    %65 = vector.broadcast %cst_42 : f32 to vector<2x128xf32>
    %66 = arith.select %63, %64, %65 : vector<2x128xi1>, vector<2x128xf32>
    %67 = arith.addf %61, %66 : vector<2x128xf32>
    %c2_i32_43 = arith.constant 2 : i32
    %68 = vector.broadcast %c2_i32_43 : i32 to vector<2x128xi32>
    %69 = arith.cmpi eq, %4, %68 : vector<2x128xi32>
    %cst_44 = arith.constant 2.500000e-01 : f32
    %cst_45 = arith.constant 0.000000e+00 : f32
    %70 = vector.broadcast %cst_44 : f32 to vector<2x128xf32>
    %71 = vector.broadcast %cst_45 : f32 to vector<2x128xf32>
    %72 = arith.select %69, %70, %71 : vector<2x128xi1>, vector<2x128xf32>
    %73 = arith.addf %67, %72 : vector<2x128xf32>
    %c3_i32_46 = arith.constant 3 : i32
    %74 = vector.broadcast %c3_i32_46 : i32 to vector<2x128xi32>
    %75 = arith.cmpi eq, %4, %74 : vector<2x128xi32>
    %cst_47 = arith.constant 2.500000e-01 : f32
    %cst_48 = arith.constant 0.000000e+00 : f32
    %76 = vector.broadcast %cst_47 : f32 to vector<2x128xf32>
    %77 = vector.broadcast %cst_48 : f32 to vector<2x128xf32>
    %78 = arith.select %75, %76, %77 : vector<2x128xi1>, vector<2x128xf32>
    %79 = arith.addf %73, %78 : vector<2x128xf32>
    %80 = arith.mulf %55, %79 : vector<2x128xf32>
    %cst_49 = arith.constant 1.000000e+00 : f32
    %81 = vector.broadcast %cst_49 : f32 to vector<2x128xf32>
    %82 = arith.subf %81, %56 : vector<2x128xf32>
    %83 = arith.mulf %82, %82 : vector<2x128xf32>
    %84 = arith.mulf %83, %80 : vector<2x128xf32>
    %cst_50 = arith.constant 0.000000e+00 : f32
    %85 = vector.broadcast %cst_50 : f32 to vector<2x128xf32>
    %86 = arith.subf %85, %84 : vector<2x128xf32>
    %c0_51 = arith.constant 0 : index
    %c0_52 = arith.constant 0 : index
    %c0_53 = arith.constant 0 : index
    %c0_54 = arith.constant 0 : index
    %87 = vector.load %arg5[%c0_51, %c0_52, %c0_53, %c0_54] : memref<1x1x2x128xf32, #tpu.memory_space<vmem>>, vector<1x1x2x128xf32>
    %88 = vector.shape_cast %87 : vector<1x1x2x128xf32> to vector<2x128xf32>
    %89 = arith.addf %88, %86 : vector<2x128xf32>
    %c0_55 = arith.constant 0 : index
    %c0_56 = arith.constant 0 : index
    %c0_57 = arith.constant 0 : index
    %c0_58 = arith.constant 0 : index
    %90 = vector.load %arg5[%c0_55, %c0_56, %c0_57, %c0_58] : memref<1x1x2x128xf32, #tpu.memory_space<vmem>>, vector<1x1x2x128xf32>
    %91 = vector.shape_cast %90 : vector<1x1x2x128xf32> to vector<2x128xf32>
    %92 = vector.shape_cast %89 : vector<2x128xf32> to vector<1x1x2x128xf32>
    tpu.vector_store %arg5[%c0_55, %c0_56, %c0_57, %c0_58], %92 {strides = array<i32>} : memref<1x1x2x128xf32, #tpu.memory_space<vmem>>, vector<1x1x2x128xf32>,
    return
  }
  func.func @transform_0(%arg0: i32, %arg1: i32, %arg2: i32) -> (i32, i32, i32, i32) {
    %c1_i32 = arith.constant 1 : i32
    %0 = arith.muli %arg1, %c1_i32 : i32
    %1 = arith.addi %0, %arg2 : i32
    %c0_i32 = arith.constant 0 : i32
    %2 = arith.minsi %1, %c0_i32 : i32
    %c0_i32_0 = arith.constant 0 : i32
    %c0_i32_1 = arith.constant 0 : i32
    %c0_i32_2 = arith.constant 0 : i32
    return %arg0, %c0_i32_0, %2, %c0_i32_1 : i32, i32, i32, i32
  }
  func.func @transform_1(%arg0: i32, %arg1: i32, %arg2: i32) -> (i32, i32, i32, i32) {
    %c1_i32 = arith.constant 1 : i32
    %0 = arith.muli %arg1, %c1_i32 : i32
    %1 = arith.addi %0, %arg2 : i32
    %c0_i32 = arith.constant 0 : i32
    %2 = arith.minsi %1, %c0_i32 : i32
    %c0_i32_0 = arith.constant 0 : i32
    %c0_i32_1 = arith.constant 0 : i32
    %c0_i32_2 = arith.constant 0 : i32
    return %arg0, %c0_i32_0, %2, %c0_i32_1 : i32, i32, i32, i32
  }
  func.func @transform_2(%arg0: i32, %arg1: i32, %arg2: i32) -> (i32, i32, i32, i32) {
    %c0_i32 = arith.constant 0 : i32
    %c0_i32_0 = arith.constant 0 : i32
    %c0_i32_1 = arith.constant 0 : i32
    return %arg0, %arg1, %c0_i32, %c0_i32_0 : i32, i32, i32, i32
  }
}

</mosaic_0001>

<llo_original>
// kernel: tpu_custom_call.1
$region0: #{tpu_custom_call.1}
  #allocation0 [shape = 'u32[]', space=smem, size = 0x4, offset = 0x4, fixed_abs, tag = 'smem constant byte address 0x4 - core index']
  #allocation1 [shape = 'u32[72,128]{1,0:T(1,128)}', space=vmem, size = 0x9000, scoped, tag = 'internal scratch']
  %s0 = inlined_call_operand.hbm [shape: f32[2,4,2,128], index: 0, kind: input, shape index: {}]
  %s1 = inlined_call_operand.hbm [shape: s32[2,1,2,128], index: 1, kind: input, shape index: {}]
  %s2 = inlined_call_operand.hbm [shape: f32[2,1,2,128], index: 2, kind: output, shape index: {}]
  %s3 = sld [smem:[#allocation0]]
  $region53: #{tpu_custom_call.1} parent=0
    _
  %s5 = ssub.s32 1, %s3
  %s6 = scalar_select 0, %s5, %s3
  $region1: #{tpu_custom_call.1} parent=0
    #allocation2 [shape = 'u8[8192]{0}', space=vmem, size = 0x2000, scoped, tag = 'input window, operand 0']
    #allocation3 [shape = 's32[2]{0}', space=sflag, size = 0x8, scoped, tag = 'scoped memory for tpu_custom_call.1']
    #allocation4 [shape = 's32[2]{0}', space=sflag, size = 0x8, scoped, tag = 'scoped memory for tpu_custom_call.1']
    #allocation5 [shape = 'u8[2048]{0}', space=vmem, size = 0x800, scoped, tag = 'input window, operand 1']
    #allocation6 [shape = 's32[2]{0}', space=sflag, size = 0x8, scoped, tag = 'scoped memory for tpu_custom_call.1']
    #allocation7 [shape = 'u8[2048]{0}', space=vmem, size = 0x800, scoped, tag = 'output window, operand 0']
    %7 = vsyncpa [#allocation3], 0
    %s8 = scalar_lea.sflag [#allocation3], 1
    %9 = vsyncpa %s8, 0
    %10 = vsyncpa [#allocation6], 0
    %s11 = scalar_lea.sflag [#allocation6], 1
    %12 = vsyncpa %s11, 0
    %13 = vsyncpa [#allocation4], 0
    %s14 = scalar_lea.sflag [#allocation4], 1
    %15 = vsyncpa %s14, 0
    loop: start=0, step=1, limit=4
    $region2: #{tpu_custom_call.1} parent=1 // loop_pre_header
      _
    $region3: #{tpu_custom_call.1} parent=1 // loop_header
      %s17 = sphi 0, %s21
      %p18 = scmp.ge.s32.totalorder %s17, 4
      %s24 = sphi 0, %s43
      %s25 = sphi 0, %s39
      %s26 = sphi 0, %s35
      %s27 = sphi 0, %s24
      %s28 = sphi 0, %s25
      %s29 = sphi 0, %s26
      %s30 = sphi 0, %s27
      %s31 = sphi 0, %s28
      %s32 = sphi 0, %s29
      %s54 = sphi 0, %s56
      %s57 = sphi 0, %s54
      %s58 = sphi 0, %s57
      %s74 = sphi 0, %s58
      %s88 = sphi 0, %s90
      %s91 = sphi 0, %s88
      %s92 = sphi 0, %s91
      %s108 = sphi 0, %s92
      %s116 = sphi 0, %s118
      %s119 = sphi 0, %s116
      %s120 = sphi 0, %s119
      %s136 = sphi 0, %s120
    $region4: #{tpu_custom_call.1} parent=1 // loop_header_branch
      %20 = sbr.rel (%p18) target = $region8
    $region5: #{tpu_custom_call.1} parent=1 // loop_body
      %s22 = ssub.s32 %s17, 1
      %s23 = ssub.s32 %s17, 2
      %s33 = sadd.s32 1, %s26
      %p34 = scmp.ge.s32.totalorder %s33, 1
      %s35 = scalar_select %p34, 0, %s33
      %s36 = sadd.s32 1, %s25
      %s37 = scalar_select %p34, %s36, %s25
      %p38 = scmp.ge.s32.totalorder %s37, 1
      %s39 = scalar_select %p38, 0, %s37
      %s40 = sadd.s32 1, %s24
      %s41 = scalar_select %p38, %s40, %s24
      %p42 = scmp.ge.s32.totalorder %s41, 2
      %s43 = scalar_select %p42, 0, %s41
      %s44 = sadd.s32 %s25, %s26
      %p45 = scmp.lt.s32.totalorder %s44, 0
      %s46 = scalar_select %p45, %s44, 0
      %s47 = sadd.s32 %s39, %s35
      %p48 = scmp.lt.s32.totalorder %s47, 0
      %s49 = scalar_select %p48, %s47, 0
      %s50 = ssub.s32 %s24, %s43
      %s51 = ssub.s32 %s46, %s49
      %s52 = sor.u32 %s50, %s51
      %p53 = scmp.eq.s32.totalorder %s52, 0
      %s55 = sadd.s32 %s54, 1
      %s56 = scalar_select %p53, %s54, %s55
      %p59 = pneg %p53
      %p60 = scmp.eq.s32.totalorder %s17, 1
      %p61 = por %p59, %p60
      %p62 = scmp.ne.s32.totalorder %s54, %s57
      %p63 = scmp.eq.s32.totalorder %s17, 0
      %p64 = por %p62, %p63
      %p65 = scmp.ne.s32.totalorder %s54, %s57
      %p66 = scmp.eq.s32.totalorder %s22, 1
      %p67 = por %p65, %p66
      %p68 = scmp.ne.s32.totalorder %s57, %s58
      %p69 = scmp.eq.s32.totalorder %s22, 0
      %p70 = por %p68, %p69
      %p71 = scmp.ne.s32.totalorder %s57, %s58
      %p72 = scmp.eq.s32.totalorder %s23, 1
      %p73 = por %p71, %p72
      %p75 = scmp.ne.s32.totalorder %s58, %s74
      %p76 = scmp.eq.s32.totalorder %s23, 0
      %p77 = por %p75, %p76
      %s78 = sadd.s32 %s25, %s26
      %p79 = scmp.lt.s32.totalorder %s78, 0
      %s80 = scalar_select %p79, %s78, 0
      %s81 = sadd.s32 %s39, %s35
      %p82 = scmp.lt.s32.totalorder %s81, 0
      %s83 = scalar_select %p82, %s81, 0
      %s84 = ssub.s32 %s24, %s43
      %s85 = ssub.s32 %s80, %s83
      %s86 = sor.u32 %s84, %s85
      %p87 = scmp.eq.s32.totalorder %s86, 0
      %s89 = sadd.s32 %s88, 1
      %s90 = scalar_select %p87, %s88, %s89
      %p93 = pneg %p87
      %p94 = scmp.eq.s32.totalorder %s17, 1
      %p95 = por %p93, %p94
      %p96 = scmp.ne.s32.totalorder %s88, %s91
      %p97 = scmp.eq.s32.totalorder %s17, 0
      %p98 = por %p96, %p97
      %p99 = scmp.ne.s32.totalorder %s88, %s91
      %p100 = scmp.eq.s32.totalorder %s22, 1
      %p101 = por %p99, %p100
      %p102 = scmp.ne.s32.totalorder %s91, %s92
      %p103 = scmp.eq.s32.totalorder %s22, 0
      %p104 = por %p102, %p103
      %p105 = scmp.ne.s32.totalorder %s91, %s92
      %p106 = scmp.eq.s32.totalorder %s23, 1
      %p107 = por %p105, %p106
      %p109 = scmp.ne.s32.totalorder %s92, %s108
      %p110 = scmp.eq.s32.totalorder %s23, 0
      %p111 = por %p109, %p110
      %s112 = ssub.s32 %s24, %s43
      %s113 = ssub.s32 %s25, %s39
      %s114 = sor.u32 %s112, %s113
      %p115 = scmp.eq.s32.totalorder %s114, 0
      %s117 = sadd.s32 %s116, 1
      %s118 = scalar_select %p115, %s116, %s117
      %p121 = pneg %p115
      %p122 = scmp.eq.s32.totalorder %s17, 1
      %p123 = por %p121, %p122
      %p124 = scmp.ne.s32.totalorder %s116, %s119
      %p125 = scmp.eq.s32.totalorder %s17, 0
      %p126 = por %p124, %p125
      %p127 = scmp.ne.s32.totalorder %s116, %s119
      %p128 = scmp.eq.s32.totalorder %s22, 1
      %p129 = por %p127, %p128
      %p130 = scmp.ne.s32.totalorder %s119, %s120
      %p131 = scmp.eq.s32.totalorder %s22, 0
      %p132 = por %p130, %p131
      %p133 = scmp.ne.s32.totalorder %s119, %s120
      %p134 = scmp.eq.s32.totalorder %s23, 1
      %p135 = por %p133, %p134
      %p137 = scmp.ne.s32.totalorder %s120, %s136
      %p138 = scmp.eq.s32.totalorder %s23, 0
      %p139 = por %p137, %p138
      %p140 = scmp.le.s32.totalorder 1, %s17
      %p141 = scmp.lt.s32.totalorder %s17, 3
      %p142 = pnand %p140, %p141
      %p143 = pneg %p142
      // Predicated region
      $region9: #{tpu_custom_call.1} parent=5 // pred_check
        _
      $region10: #{tpu_custom_call.1} parent=5 // pred_check_branch
        %145 = sbr.rel (%p142) target = $region12
      $region11: #{tpu_custom_call.1} parent=5 // pred_region
        %s146 = ssub.s32 %s17, 1
      $region12: #{tpu_custom_call.1} parent=5 // pred_fallthru
        _
      %p147 = scmp.lt.s32.totalorder %s17, 2
      // Predicated region
      $region13: #{tpu_custom_call.1} parent=5 // pred_check
        %p148 = pneg %p147
      $region14: #{tpu_custom_call.1} parent=5 // pred_check_branch
        %150 = sbr.rel (%p148) target = $region16
      $region15: #{tpu_custom_call.1} parent=5 // pred_region
        // Predicated region
        $region17: #{tpu_custom_call.1} parent=15 // pred_check
          %p151 = pneg %p64
        $region18: #{tpu_custom_call.1} parent=15 // pred_check_branch
          %153 = sbr.rel (%p151) target = $region20
        $region19: #{tpu_custom_call.1} parent=15 // pred_region
          %s154 = sand.u32 %s54, 1
          %s155 = scalar_lea.sflag [#allocation3], %s154
          %s156 = sand.u32 %s54, 1
          %s157 = smul.addr %s156, 8
          %s158 = scalar_lea.vmem [#allocation2], %s157
          %s159 = sadd.s32 %s25, %s26
          %p160 = scmp.lt.s32.totalorder %s159, 0
          %s161 = scalar_select %p160, %s159, 0
          %163 = vsyncadd %s155, 0
          %s164 = smul.addr %s24, 4
          %s165 = sadd.s32 %s161, %s164
          %s166 = smul.addr %s165, 2
          %s167 = scalar_lea.hbm %s0, %s166
          %s168 = sshll.u32 %s167, 4
          %s169 = int_to_ptr.hbm [resolvable:$true] %s168
          %s170 = sshll.u32 %s158, 4
          %s171 = int_to_ptr.vmem [resolvable:$true] %s170
          %176 = dma.hbm_to_vmem [thread:$0]  %s169, 128, %s171, %s155, 32, 32, 2
        $region20: #{tpu_custom_call.1} parent=15 // pred_fallthru
          _
        // Predicated region
        $region21: #{tpu_custom_call.1} parent=15 // pred_check
          %p177 = pneg %p98
        $region22: #{tpu_custom_call.1} parent=15 // pred_check_branch
          %179 = sbr.rel (%p177) target = $region24
        $region23: #{tpu_custom_call.1} parent=15 // pred_region
          %s180 = sand.u32 %s88, 1
          %s181 = scalar_lea.sflag [#allocation6], %s180
          %s182 = sand.u32 %s88, 1
          %s183 = smul.addr %s182, 2
          %s184 = scalar_lea.vmem [#allocation5], %s183
          %s185 = sadd.s32 %s25, %s26
          %p186 = scmp.lt.s32.totalorder %s185, 0
          %s187 = scalar_select %p186, %s185, 0
          %189 = vsyncadd %s181, 0
          %s190 = sadd.s32 %s187, %s24
          %s191 = smul.addr %s190, 2
          %s192 = scalar_lea.hbm %s1, %s191
          %s194 = sshll.u32 %s192, 4
          %s195 = int_to_ptr.hbm [resolvable:$true] %s194
          %s196 = sshll.u32 %s184, 4
          %s197 = int_to_ptr.vmem [resolvable:$true] %s196
          %199 = dma.hbm_to_vmem [thread:$0]  %s195, 32, %s197, %s181
        $region24: #{tpu_custom_call.1} parent=15 // pred_fallthru
          _
      $region16: #{tpu_custom_call.1} parent=5 // pred_fallthru
        _
      %p200 = scmp.le.s32.totalorder 1, %s17
      %p201 = scmp.lt.s32.totalorder %s17, 3
      %p202 = pnand %p200, %p201
      %p203 = pneg %p202
      // Predicated region
      $region25: #{tpu_custom_call.1} parent=5 // pred_check
        _
      $region26: #{tpu_custom_call.1} parent=5 // pred_check_branch
        %205 = sbr.rel (%p202) target = $region28
      $region27: #{tpu_custom_call.1} parent=5 // pred_region
        %s206 = ssub.s32 %s17, 1
        %s207 = sand.u32 %s57, 1
        %s208 = scalar_lea.sflag [#allocation3], %s207
        %s209 = sand.u32 %s57, 1
        %s210 = smul.addr %s209, 8
        %s211 = scalar_lea.vmem [#allocation2], %s210
        // Predicated region
        $region29: #{tpu_custom_call.1} parent=27 // pred_check
          %p212 = pneg %p70
        $region30: #{tpu_custom_call.1} parent=27 // pred_check_branch
          %214 = sbr.rel (%p212) target = $region32
        $region31: #{tpu_custom_call.1} parent=27 // pred_region
          %216 = dma.done %s208, 128
        $region32: #{tpu_custom_call.1} parent=27 // pred_fallthru
          _
        %s217 = sand.u32 %s91, 1
        %s218 = scalar_lea.sflag [#allocation6], %s217
        %s219 = sand.u32 %s91, 1
        %s220 = smul.addr %s219, 2
        %s221 = scalar_lea.vmem [#allocation5], %s220
        // Predicated region
        $region33: #{tpu_custom_call.1} parent=27 // pred_check
          %p222 = pneg %p104
        $region34: #{tpu_custom_call.1} parent=27 // pred_check_branch
          %224 = sbr.rel (%p222) target = $region36
        $region35: #{tpu_custom_call.1} parent=27 // pred_region
          %226 = dma.done %s218, 32
        $region36: #{tpu_custom_call.1} parent=27 // pred_fallthru
          _
        %s227 = sand.u32 %s57, 1
        %s228 = scalar_lea.sflag [#allocation3], %s227
        %s229 = sand.u32 %s57, 1
        %s230 = smul.addr %s229, 8
        %s231 = scalar_lea.vmem [#allocation2], %s230
        %p232 = pneg %p70
        %p233 = pneg %p67
        %s234 = sand.u32 %s91, 1
        %s235 = scalar_lea.sflag [#allocation6], %s234
        %s236 = sand.u32 %s91, 1
        %s237 = smul.addr %s236, 2
        %s238 = scalar_lea.vmem [#allocation5], %s237
        %p239 = pneg %p104
        %p240 = pneg %p101
        %p241 = pneg %p132
        %p242 = pneg %p129
        %s243 = sand.u32 %s119, 1
        %s244 = scalar_lea.sflag [#allocation4], %s243
        %s245 = sand.u32 %s119, 1
        %s246 = smul.addr %s245, 2
        %s247 = scalar_lea.vmem [#allocation7], %s246
        %s248 = sadd.s32 %s28, %s29
        %p249 = scmp.lt.s32.totalorder %s248, 0
        %s250 = scalar_select %p249, %s248, 0
        %s251 = sadd.s32 %s28, %s29
        %p252 = scmp.lt.s32.totalorder %s251, 0
        %s253 = scalar_select %p252, %s251, 0
        %p254 = scmp.eq.s32.totalorder %s29, 0
        // Predicated region
        $region37: #{tpu_custom_call.1} parent=27 // pred_check
          %p255 = pneg %p254
        $region38: #{tpu_custom_call.1} parent=27 // pred_check_branch
          %257 = sbr.rel (%p255) target = $region40
        $region39: #{tpu_custom_call.1} parent=27 // pred_region
          %258 = vst [vmem:[%s247] sm:$0x3] 0.0
        $region40: #{tpu_custom_call.1} parent=27 // pred_fallthru
          _
        %v259 = vld [vmem:[%s221] sm:$0x3]
        %v260 = vld [vmem:[%s211] sm:$0x3]
        %s261 = scalar_lea.vmem %s211, 2 [#allocation2]
        %v262 = vld [vmem:[%s261] sm:$0x3]
        %v263 = vmax.f32 %v260, %v262
        %s264 = scalar_lea.vmem %s211, 4 [#allocation2]
        %v265 = vld [vmem:[%s264] sm:$0x3]
        %v266 = vmax.f32 %v263, %v265
        %s267 = scalar_lea.vmem %s211, 6 [#allocation2]
        %v268 = vld [vmem:[%s267] sm:$0x3]
        %v269 = vmax.f32 %v266, %v268
        %v270 = vsub.f32 %v260, %v269
        %v271 = vmul.f32 %v270, 1.442695
        %v272 = vpow.pop %v271
        %vm273 = vcmp.eq.s32.totalorder %v259, 0
        %v274 = vsel %vm273, %v270, 0.0
        %v275 = vsub.f32 %v262, %v269
        %v276 = vmul.f32 %v275, 1.442695
        %v277 = vpow.pop %v276
        %v278 = vadd.f32 %v272, %v277
        %vm279 = vcmp.eq.s32.totalorder %v259, 1
        %v280 = vsel %vm279, %v275, 0.0
        %v281 = vadd.f32 %v274, %v280
        %v282 = vsub.f32 %v265, %v269
        %v283 = vmul.f32 %v282, 1.442695
        %v284 = vpow.pop %v283
        %v285 = vadd.f32 %v278, %v284
        %vm286 = vcmp.eq.s32.totalorder %v259, 2
        %v287 = vsel %vm286, %v282, 0.0
        %v288 = vadd.f32 %v281, %v287
        %v289 = vsub.f32 %v268, %v269
        %v290 = vmul.f32 %v289, 1.442695
        %v291 = vpow.pop %v290
        %v292 = vadd.f32 %v285, %v291
        %vm293 = vcmp.eq.s32.totalorder %v259, 3
        %v294 = vsel %vm293, %v289, 0.0
        %v295 = vadd.f32 %v288, %v294
        %v296 = vlog2.pop %v292
        %v297 = vmul.f32 %v296, 0.6931472
        %v298 = vsub.f32 %v295, %v297
        %v299 = vmul.f32 %v298, 1.442695
        %v300 = vpow.pop %v299
        %v301 = vsel %vm273, 0.25, 0.0
        %v302 = vsel %vm279, 0.25, 0.0
        %v303 = vadd.f32 %v301, %v302
        %v304 = vsel %vm286, 0.25, 0.0
        %v305 = vadd.f32 %v303, %v304
        %v306 = vsel %vm293, 0.25, 0.0
        %v307 = vadd.f32 %v305, %v306
        %v308 = vmul.f32 %v298, %v307
        %v309 = vsub.f32 1.0, %v300
        %v310 = vmul.f32 %v309, %v309
        %v311 = vmul.f32 %v310, %v308
        %v312 = vsub.f32 0.0, %v311
        %v313 = vld [vmem:[%s247] sm:$0x3]
        %v314 = vadd.f32 %v313, %v312
        %315 = vst [vmem:[%s247] sm:$0x3] %v314
        %s316 = sand.u32 %s119, 1
        %s317 = scalar_lea.sflag [#allocation4], %s316
        %s318 = sand.u32 %s119, 1
        %s319 = smul.addr %s318, 2
        %s320 = scalar_lea.vmem [#allocation7], %s319
        // Predicated region
        $region41: #{tpu_custom_call.1} parent=27 // pred_check
          %p321 = pneg %p129
        $region42: #{tpu_custom_call.1} parent=27 // pred_check_branch
          %323 = sbr.rel (%p321) target = $region44
        $region43: #{tpu_custom_call.1} parent=27 // pred_region
          %325 = vsyncadd %s317, 0
          %s326 = sadd.s32 %s28, %s27
          %s327 = smul.addr %s326, 2
          %s328 = scalar_lea.hbm %s2, %s327
          %s330 = sshll.u32 %s320, 4
          %s331 = int_to_ptr.vmem [resolvable:$true] %s330
          %s332 = sshll.u32 %s328, 4
          %s333 = int_to_ptr.hbm [resolvable:$true] %s332
          %335 = dma.vmem_to_hbm [thread:$0]  %s331, 32, %s333, %s317
        $region44: #{tpu_custom_call.1} parent=27 // pred_fallthru
          _
      $region28: #{tpu_custom_call.1} parent=5 // pred_fallthru
        _
      %p336 = scmp.le.s32.totalorder 2, %s17
      // Predicated region
      $region45: #{tpu_custom_call.1} parent=5 // pred_check
        %p337 = pneg %p336
      $region46: #{tpu_custom_call.1} parent=5 // pred_check_branch
        %339 = sbr.rel (%p337) target = $region48
      $region47: #{tpu_custom_call.1} parent=5 // pred_region
        %s340 = ssub.s32 %s17, 2
        // Predicated region
        $region49: #{tpu_custom_call.1} parent=47 // pred_check
          %p341 = pneg %p135
        $region50: #{tpu_custom_call.1} parent=47 // pred_check_branch
          %343 = sbr.rel (%p341) target = $region52
        $region51: #{tpu_custom_call.1} parent=47 // pred_region
          %s344 = sand.u32 %s120, 1
          %s345 = scalar_lea.sflag [#allocation4], %s344
          %s346 = sand.u32 %s120, 1
          %s347 = smul.addr %s346, 2
          %s348 = scalar_lea.vmem [#allocation7], %s347
          %350 = dma.done %s345, 32
        $region52: #{tpu_custom_call.1} parent=47 // pred_fallthru
          _
      $region48: #{tpu_custom_call.1} parent=5 // pred_fallthru
        _
    $region6: #{tpu_custom_call.1} parent=1 // loop_footer
      %s21 = sadd.s32 1, %s17
    $region7: #{tpu_custom_call.1} parent=1 // loop_footer_branch
      %16 = sbr.rel target = $region3
    $region8: #{tpu_custom_call.1} parent=1 // loop_exit
      _
    %351 = vsyncpa [#allocation3], 1
    %s352 = scalar_lea.sflag [#allocation3], 1
    %353 = vsyncpa %s352, 1
    %354 = vsyncpa [#allocation6], 1
    %s355 = scalar_lea.sflag [#allocation6], 1
    %356 = vsyncpa %s355, 1
    %357 = vsyncpa [#allocation4], 1
    %s358 = scalar_lea.sflag [#allocation4], 1
    %359 = vsyncpa %s358, 1

</llo_original>
